<compile_context>
chip_gen: v6e
topology: v6e:2x2x1
jax: 0.10.0
libtpu: 0.0.40
codegen_flags: <defaults>
</compile_context>

<pallas_src>
import jax
import jax.numpy as jnp
from jax.experimental import pallas as pl
from jax.experimental.pallas import tpu as pltpu


def _round_up(x, m):
    return (x + m - 1) // m * m


# ---------------------------------------------------------------------------
# Fused kernel (Bt images per grid step):
#   im2col conv (single K=9*Cin matmul, BN/bias folded) + ReLU
#   -> block-diagonal global-average-pool matmul -> FC head.
# ---------------------------------------------------------------------------
def _fused_fwd_kernel(x_ref, wc_ref, bc_ref, pm_ref, wfc_ref, bfc_ref, o_ref):
    # x_ref : [Bt*HWp, 9*Cin]   im2col patches (compute dtype)
    # wc_ref: [9*Cin, cout_pad] folded conv+BN weights
    # bc_ref: [1, cout_pad]     folded conv bias + BN affine (f32)
    # pm_ref: [Bt, Bt*HWp]      block-diagonal 1/(H*W) pooling weights (f32)
    # wfc_ref:[cout_pad, nc_pad] FC weights
    # bfc_ref:[1, nc_pad]       FC bias (f32)
    # o_ref : [Bt, nc_pad]      logits (f32)
    y = jnp.dot(x_ref[...], wc_ref[...], preferred_element_type=jnp.float32)
    y = jnp.maximum(y + bc_ref[...], 0.0)                   # [Bt*HWp, cout_pad]
    pooled = jnp.dot(pm_ref[...], y,
                     preferred_element_type=jnp.float32)    # [Bt, cout_pad]
    logits = jnp.dot(pooled.astype(wfc_ref.dtype), wfc_ref[...],
                     preferred_element_type=jnp.float32) + bfc_ref[...]
    o_ref[...] = logits.astype(o_ref.dtype)


def fl_model_forward(x_nchw, params, *, compute_dtype=jnp.float32,
                     batch_tile=None):
    """Forward pass. x_nchw: [B, Cin, H, W] float32.

    compute_dtype: jnp.float32 (exact) or jnp.bfloat16 (halves HBM/VMEM bytes
    on all generations; MXU-input only, accumulation & epilogue stay f32).
    """
    (conv_w, conv_b, bn_gamma, bn_beta, bn_mean, bn_var, fc_w, fc_b) = params
    B, Cin, H, W = x_nchw.shape
    Cout = conv_w.shape[0]
    num_classes = fc_w.shape[0]

    K = 9 * Cin                                   # packed contraction dim
    HW = H * W
    HWp = _round_up(HW, 8)                        # per-image row pad (sublane)
    cout_pad = _round_up(max(Cout, 128), 128)
    nc_pad = _round_up(max(num_classes, 128), 128)

    # Batch tile: prefer 8 images/step, but keep >= 2 grid steps (v7x megacore).
    if batch_tile is None:
        Bt = 8 if B >= 16 else max(1, B // 2)
    else:
        Bt = batch_tile
    num_tiles = pl.cdiv(B, Bt)
    B_pad = num_tiles * Bt
    M_step = Bt * HWp                             # MXU M-dim per grid step

    # ---- fold BatchNorm (eval) + conv bias into matmul weights / bias ------
    scale = bn_gamma * jax.lax.rsqrt(bn_var + 1e-5)               # [Cout]
    # conv_w [Cout,Cin,3,3] -> [3,3,Cin,Cout] -> [9*Cin, Cout], BN scale folded.
    w2d = jnp.transpose(conv_w, (2, 3, 1, 0)).reshape(K, Cout) * scale[None, :]
    b_fold = (conv_b - bn_mean) * scale + bn_beta                 # [Cout]

    wc = jnp.zeros((K, cout_pad), compute_dtype)
    wc = wc.at[:, :Cout].set(w2d.astype(compute_dtype))
    bc = jnp.zeros((1, cout_pad), jnp.float32).at[0, :Cout].set(b_fold)
    wfc = jnp.zeros((cout_pad, nc_pad), compute_dtype)
    wfc = wfc.at[:Cout, :num_classes].set(fc_w.T.astype(compute_dtype))
    bfc = jnp.zeros((1, nc_pad), jnp.float32).at[0, :num_classes].set(fc_b)

    # Block-diagonal pooling matrix: 1/(H*W) on each image's valid rows,
    # zeros on the per-image sublane-pad rows.
    row = jnp.concatenate([jnp.full((HW,), 1.0 / HW, jnp.float32),
                           jnp.zeros((HWp - HW,), jnp.float32)])
    pm = jnp.kron(jnp.eye(Bt, dtype=jnp.float32), row[None, :])   # [Bt, Bt*HWp]

    # ---- im2col: [B, Cin, H, W] -> [num_tiles*Bt*HWp, 9*Cin] ---------------
    x = jnp.transpose(x_nchw, (0, 2, 3, 1))                       # [B,H,W,Cin]
    xp = jnp.pad(x, ((0, 0), (1, 1), (1, 1), (0, 0)))             # [B,H+2,W+2,Cin]
    patches = jnp.stack(
        [xp[:, dh:dh + H, dw:dw + W, :] for dh in range(3) for dw in range(3)],
        axis=3)                                                   # [B,H,W,9,Cin]
    x_cols = patches.reshape(B, HW, K)
    x_cols = jnp.pad(x_cols, ((0, B_pad - B), (0, HWp - HW), (0, 0)))
    x_flat = x_cols.reshape(num_tiles * M_step, K).astype(compute_dtype)

    # ---- VMEM budget / cost estimate ---------------------------------------
    itemsize = jnp.dtype(compute_dtype).itemsize
    lane = 128                                    # K < 128 pads to one lane tile
    vmem_est = (2 * M_step * lane * itemsize      # double-buffered x block
                + 3 * M_step * cout_pad * 4       # y temps (dot / +bias / relu)
                + _round_up(K, 8) * cout_pad * itemsize
                + cout_pad * nc_pad * itemsize
                + _round_up(Bt, 8) * M_step * 4   # pm
                + 2 * _round_up(Bt, 8) * nc_pad * 4
                + (cout_pad + nc_pad) * 4 * 8)
    vmem_limit = int(min(48 * 1024 * 1024, max(16 * 1024 * 1024, 2 * vmem_est)))

    flops = num_tiles * (2 * M_step * K * cout_pad          # conv matmul
                         + 2 * Bt * M_step * cout_pad       # pool matmul
                         + 2 * Bt * cout_pad * nc_pad)      # FC
    bytes_accessed = (x_flat.size * itemsize
                      + wc.size * itemsize + wfc.size * itemsize
                      + (bc.size + bfc.size + pm.size) * 4
                      + num_tiles * Bt * nc_pad * 4)

    out = pl.pallas_call(
        _fused_fwd_kernel,
        out_shape=jax.ShapeDtypeStruct((num_tiles, Bt, nc_pad), jnp.float32),
        grid_spec=pltpu.PrefetchScalarGridSpec(
            num_scalar_prefetch=0,
            grid=(num_tiles,),
            in_specs=[
                pl.BlockSpec((M_step, K), lambda t: (t, 0)),          # x
                pl.BlockSpec((K, cout_pad), lambda t: (0, 0)),        # wc
                pl.BlockSpec((1, cout_pad), lambda t: (0, 0)),        # bc
                pl.BlockSpec((Bt, M_step), lambda t: (0, 0)),         # pm
                pl.BlockSpec((cout_pad, nc_pad), lambda t: (0, 0)),   # wfc
                pl.BlockSpec((1, nc_pad), lambda t: (0, 0)),          # bfc
            ],
            out_specs=pl.BlockSpec((None, Bt, nc_pad), lambda t: (t, 0, 0)),
        ),
        compiler_params=pltpu.CompilerParams(
            dimension_semantics=("parallel",),        # megacore / 2-TC sharding
            vmem_limit_bytes=vmem_limit),
        cost_estimate=pl.CostEstimate(
            flops=flops, transcendentals=0, bytes_accessed=bytes_accessed),
    )(x_flat, wc, bc, pm, wfc, bfc)

    return out.reshape(num_tiles * Bt, nc_pad)[:B, :num_classes]


# ---------------------------------------------------------------------------
# Pure-JAX reference for correctness checking.
# ---------------------------------------------------------------------------
def reference_forward(x_nchw, params):
    (conv_w, conv_b, bn_gamma, bn_beta, bn_mean, bn_var, fc_w, fc_b) = params
    y = jax.lax.conv_general_dilated(
        x_nchw, conv_w, window_strides=(1, 1), padding=((1, 1), (1, 1)),
        dimension_numbers=('NCHW', 'OIHW', 'NCHW'))
    y = y + conv_b[None, :, None, None]
    y = (y - bn_mean[None, :, None, None]) * \
        jax.lax.rsqrt(bn_var[None, :, None, None] + 1e-5) * \
        bn_gamma[None, :, None, None] + bn_beta[None, :, None, None]
    y = jnp.maximum(y, 0.0)
    pooled = jnp.mean(y, axis=(2, 3))                          # [B, Cout]
    return pooled @ fc_w.T + fc_b


def init_params(key, Cin=4, Cout=8, num_classes=10):
    ks = jax.random.split(key, 6)
    conv_w = 0.1 * jax.random.normal(ks[0], (Cout, Cin, 3, 3), jnp.float32)
    conv_b = 0.1 * jax.random.normal(ks[1], (Cout,), jnp.float32)
    bn_gamma = jnp.ones((Cout,), jnp.float32) + 0.05 * jax.random.normal(ks[2], (Cout,))
    bn_beta = 0.05 * jax.random.normal(ks[3], (Cout,), jnp.float32)
    bn_mean = 0.1 * jax.random.normal(ks[4], (Cout,), jnp.float32)
    bn_var = jnp.abs(jax.random.normal(ks[5], (Cout,), jnp.float32)) + 0.5
    kf = jax.random.split(ks[5], 2)
    fc_w = 0.1 * jax.random.normal(kf[0], (num_classes, Cout), jnp.float32)
    fc_b = 0.1 * jax.random.normal(kf[1], (num_classes,), jnp.float32)
    return (conv_w, conv_b, bn_gamma, bn_beta, bn_mean, bn_var, fc_w, fc_b)


if __name__ == "__main__":
    key = jax.random.PRNGKey(0)
    kx, kp = jax.random.split(key)
    params = init_params(kp)

    # 1) Small-batch correctness check (B=2 -> Bt=1, grid=(2,)).
    x = jax.random.normal(kx, (2, 4, 16, 16), jnp.float32)     # NCHW input
    logits = jax.block_until_ready(fl_model_forward(x, params))
    ref = jax.block_until_ready(reference_forward(x, params))
    assert logits.shape == (2, 10), logits.shape
    assert jnp.allclose(logits, ref, atol=1e-4, rtol=1e-4), \
        f"max abs err {jnp.max(jnp.abs(logits - ref))}"

    # 2) Batch-tiled path (B=16 -> Bt=8, grid=(2,)), f32.
    xb = jax.random.normal(jax.random.PRNGKey(1), (16, 4, 16, 16), jnp.float32)
    logits_b = jax.block_until_ready(fl_model_forward(xb, params))
    ref_b = jax.block_until_ready(reference_forward(xb, params))
    assert logits_b.shape == (16, 10), logits_b.shape
    assert jnp.allclose(logits_b, ref_b, atol=1e-4, rtol=1e-4), \
        f"max abs err {jnp.max(jnp.abs(logits_b - ref_b))}"

    # 3) bf16 throughput mode smoke test (looser tolerance vs f32 reference).
    logits_bf = jax.block_until_ready(
        fl_model_forward(xb, params, compute_dtype=jnp.bfloat16))
    assert logits_bf.shape == (16, 10), logits_bf.shape
    assert jnp.allclose(logits_bf, ref_b, atol=1e-1, rtol=1e-1), \
        f"bf16 max abs err {jnp.max(jnp.abs(logits_bf - ref_b))}"

    print("KERNEL_OK")
</pallas_src>

<mosaic_0001>
module attributes {stable_mosaic.version = 11 : i64} {
  func.func @_fused_fwd_kernel(%arg0: i32, %arg1: memref<256x36xf32, #tpu.memory_space<vmem>>, %arg2: memref<36x128xf32, #tpu.memory_space<vmem>>, %arg3: memref<1x128xf32, #tpu.memory_space<vmem>>, %arg4: memref<1x256xf32, #tpu.memory_space<vmem>>, %arg5: memref<128x128xf32, #tpu.memory_space<vmem>>, %arg6: memref<1x128xf32, #tpu.memory_space<vmem>>, %arg7: memref<1x1x128xf32, #tpu.memory_space<vmem>>) attributes {dimension_semantics = [#tpu.dimension_semantics<parallel>], iteration_bounds = array<i64: 2>, scalar_prefetch = 0 : i64, scratch_operands = 0 : i64, tpu.core_type = #tpu.core_type<tc>, window_params = [{transform_indices = @transform_0, window_bounds = array<i64: 256, 36>}, {pipeline_mode = #tpu.pipeline_mode<synchronous>, transform_indices = @transform_1, window_bounds = array<i64: 36, 128>}, {pipeline_mode = #tpu.pipeline_mode<synchronous>, transform_indices = @transform_2, window_bounds = array<i64: 1, 128>}, {pipeline_mode = #tpu.pipeline_mode<synchronous>, transform_indices = @transform_3, window_bounds = array<i64: 1, 256>}, {pipeline_mode = #tpu.pipeline_mode<synchronous>, transform_indices = @transform_4, window_bounds = array<i64: 128, 128>}, {pipeline_mode = #tpu.pipeline_mode<synchronous>, transform_indices = @transform_5, window_bounds = array<i64: 1, 128>}, {transform_indices = @transform_6, window_bounds = array<i64: 1, 1, 128>}]} {
    %c0 = arith.constant 0 : index
    %c0_0 = arith.constant 0 : index
    %0 = vector.load %arg1[%c0, %c0_0] : memref<256x36xf32, #tpu.memory_space<vmem>>, vector<256x36xf32>
    %c0_1 = arith.constant 0 : index
    %c0_2 = arith.constant 0 : index
    %1 = vector.load %arg2[%c0_1, %c0_2] : memref<36x128xf32, #tpu.memory_space<vmem>>, vector<36x128xf32>
    %cst = arith.constant dense<0.000000e+00> : vector<256x128xf32>
    %2 = tpu.matmul %0, %1, %cst {dimension_numbers = #tpu.dot_dimension_numbers<[1], [0], [0], [1], [0, 0, 1, 1], [], []>} : vector<256x36xf32>, vector<36x128xf32>, vector<256x128xf32> -> vector<256x128xf32>
    %c0_3 = arith.constant 0 : index
    %c0_4 = arith.constant 0 : index
    %3 = vector.load %arg3[%c0_3, %c0_4] : memref<1x128xf32, #tpu.memory_space<vmem>>, vector<1x128xf32>
    %4 = vector.broadcast %3 : vector<1x128xf32> to vector<256x128xf32>
    %5 = arith.addf %2, %4 : vector<256x128xf32>
    %cst_5 = arith.constant 0.000000e+00 : f32
    %6 = vector.broadcast %cst_5 : f32 to vector<256x128xf32>
    %7 = arith.maximumf %5, %6 : vector<256x128xf32>
    %c0_6 = arith.constant 0 : index
    %c0_7 = arith.constant 0 : index
    %8 = vector.load %arg4[%c0_6, %c0_7] : memref<1x256xf32, #tpu.memory_space<vmem>>, vector<1x256xf32>
    %cst_8 = arith.constant dense<0.000000e+00> : vector<1x128xf32>
    %9 = tpu.matmul %8, %7, %cst_8 {dimension_numbers = #tpu.dot_dimension_numbers<[1], [0], [0], [1], [0, 0, 1, 1], [], []>} : vector<1x256xf32>, vector<256x128xf32>, vector<1x128xf32> -> vector<1x128xf32>
    %c0_9 = arith.constant 0 : index
    %c0_10 = arith.constant 0 : index
    %10 = vector.load %arg5[%c0_9, %c0_10] : memref<128x128xf32, #tpu.memory_space<vmem>>, vector<128x128xf32>
    %cst_11 = arith.constant dense<0.000000e+00> : vector<1x128xf32>
    %11 = tpu.matmul %9, %10, %cst_11 {dimension_numbers = #tpu.dot_dimension_numbers<[1], [0], [0], [1], [0, 0, 1, 1], [], []>} : vector<1x128xf32>, vector<128x128xf32>, vector<1x128xf32> -> vector<1x128xf32>
    %c0_12 = arith.constant 0 : index
    %c0_13 = arith.constant 0 : index
    %12 = vector.load %arg6[%c0_12, %c0_13] : memref<1x128xf32, #tpu.memory_space<vmem>>, vector<1x128xf32>
    %13 = arith.addf %11, %12 : vector<1x128xf32>
    %c0_14 = arith.constant 0 : index
    %c0_15 = arith.constant 0 : index
    %c0_16 = arith.constant 0 : index
    %14 = vector.load %arg7[%c0_14, %c0_15, %c0_16] : memref<1x1x128xf32, #tpu.memory_space<vmem>>, vector<1x1x128xf32>
    %15 = vector.shape_cast %14 : vector<1x1x128xf32> to vector<1x128xf32>
    %16 = vector.shape_cast %13 : vector<1x128xf32> to vector<1x1x128xf32>
    tpu.vector_store %arg7[%c0_14, %c0_15, %c0_16], %16 {strides = array<i32>} : memref<1x1x128xf32, #tpu.memory_space<vmem>>, vector<1x1x128xf32>,
    return
  }
  func.func @transform_0(%arg0: i32) -> (i32, i32) {
    %c0_i32 = arith.constant 0 : i32
    %c0_i32_0 = arith.constant 0 : i32
    return %arg0, %c0_i32 : i32, i32
  }
  func.func @transform_1(%arg0: i32) -> (i32, i32) {
    %c0_i32 = arith.constant 0 : i32
    %c0_i32_0 = arith.constant 0 : i32
    %c0_i32_1 = arith.constant 0 : i32
    return %c0_i32, %c0_i32_0 : i32, i32
  }
  func.func @transform_2(%arg0: i32) -> (i32, i32) {
    %c0_i32 = arith.constant 0 : i32
    %c0_i32_0 = arith.constant 0 : i32
    %c0_i32_1 = arith.constant 0 : i32
    return %c0_i32, %c0_i32_0 : i32, i32
  }
  func.func @transform_3(%arg0: i32) -> (i32, i32) {
    %c0_i32 = arith.constant 0 : i32
    %c0_i32_0 = arith.constant 0 : i32
    %c0_i32_1 = arith.constant 0 : i32
    return %c0_i32, %c0_i32_0 : i32, i32
  }
  func.func @transform_4(%arg0: i32) -> (i32, i32) {
    %c0_i32 = arith.constant 0 : i32
    %c0_i32_0 = arith.constant 0 : i32
    %c0_i32_1 = arith.constant 0 : i32
    return %c0_i32, %c0_i32_0 : i32, i32
  }
  func.func @transform_5(%arg0: i32) -> (i32, i32) {
    %c0_i32 = arith.constant 0 : i32
    %c0_i32_0 = arith.constant 0 : i32
    %c0_i32_1 = arith.constant 0 : i32
    return %c0_i32, %c0_i32_0 : i32, i32
  }
  func.func @transform_6(%arg0: i32) -> (i32, i32, i32) {
    %c0_i32 = arith.constant 0 : i32
    %c0_i32_0 = arith.constant 0 : i32
    %c0_i32_1 = arith.constant 0 : i32
    return %arg0, %c0_i32, %c0_i32_0 : i32, i32, i32
  }
}

</mosaic_0001>

<llo_original>
// kernel: tpu_custom_call.1
$region0: #{tpu_custom_call.1}
  #allocation0 [shape = 'u32[]', space=smem, size = 0x4, offset = 0x4, fixed_abs, tag = 'smem constant byte address 0x4 - core index']
  #allocation1 [shape = 'u32[144,128]{1,0:T(1,128)}', space=vmem, size = 0x12000, scoped, tag = 'internal scratch']
  %s0 = inlined_call_operand.vmem [shape: f32[512,36], index: 0, kind: input, shape index: {}]
  %s1 = inlined_call_operand.vmem [shape: f32[36,128], index: 1, kind: input, shape index: {}]
  %s2 = inlined_call_operand.vmem [shape: f32[1,128], index: 2, kind: input, shape index: {}]
  %s3 = inlined_call_operand.vmem [shape: f32[1,256], index: 3, kind: input, shape index: {}]
  %s4 = inlined_call_operand.vmem [shape: f32[128,128], index: 4, kind: input, shape index: {}]
  %s5 = inlined_call_operand.vmem [shape: f32[1,128], index: 5, kind: input, shape index: {}]
  %s6 = inlined_call_operand.hbm [shape: f32[2,1,128], index: 6, kind: output, shape index: {}]
  %s7 = sld [smem:[#allocation0]]
  $region57: #{tpu_custom_call.1} parent=0
    _
  %s9 = ssub.s32 1, %s7
  %s10 = scalar_select 0, %s9, %s7
  $region1: #{tpu_custom_call.1} parent=0
    #allocation2 [shape = 'u8[1024]{0}', space=vmem, size = 0x400, scoped, tag = 'output window, operand 0']
    #allocation3 [shape = 's32[2]{0}', space=sflag, size = 0x8, scoped, tag = 'scoped memory for tpu_custom_call.1']
    %11 = vsyncpa [#allocation3], 0
    %s12 = scalar_lea.sflag [#allocation3], 1
    %13 = vsyncpa %s12, 0
    loop: start=0, step=1, limit=4
    $region2: #{tpu_custom_call.1} parent=1 // loop_pre_header
      _
    $region3: #{tpu_custom_call.1} parent=1 // loop_header
      %s15 = sphi 0, %s19
      %p16 = scmp.ge.s32.totalorder %s15, 4
      %s25 = sphi 0, %s27
      %s28 = sphi 0, %s25
      %s29 = sphi 0, %s28
      %s45 = sphi 0, %s29
      %s49 = sphi 0, %s49
      %s51 = sphi 0, %s49
      %s52 = sphi 0, %s51
      %s66 = sphi 0, %s52
      %s70 = sphi 0, %s70
      %s72 = sphi 0, %s70
      %s73 = sphi 0, %s72
      %s87 = sphi 0, %s73
      %s91 = sphi 0, %s91
      %s93 = sphi 0, %s91
      %s94 = sphi 0, %s93
      %s108 = sphi 0, %s94
      %s112 = sphi 0, %s112
      %s114 = sphi 0, %s112
      %s115 = sphi 0, %s114
      %s129 = sphi 0, %s115
      %s133 = sphi 0, %s133
      %s135 = sphi 0, %s133
      %s136 = sphi 0, %s135
      %s150 = sphi 0, %s136
      %s156 = sphi 0, %s158
      %s159 = sphi 0, %s156
      %s160 = sphi 0, %s159
      %s176 = sphi 0, %s160
    $region4: #{tpu_custom_call.1} parent=1 // loop_header_branch
      %18 = sbr.rel (%p16) target = $region8
    $region5: #{tpu_custom_call.1} parent=1 // loop_body
      %s20 = ssub.s32 %s15, 1
      %s21 = ssub.s32 %s15, 2
      %s22 = sadd.s32 %s15, 1
      %s23 = ssub.s32 %s15, %s22
      %p24 = scmp.eq.s32.totalorder %s23, 0
      %s26 = sadd.s32 %s25, 1
      %s27 = scalar_select %p24, %s25, %s26
      %p30 = pneg %p24
      %p31 = scmp.eq.s32.totalorder %s15, 1
      %p32 = por %p30, %p31
      %p33 = scmp.ne.s32.totalorder %s25, %s28
      %p34 = scmp.eq.s32.totalorder %s15, 0
      %p35 = por %p33, %p34
      %p36 = scmp.ne.s32.totalorder %s25, %s28
      %p37 = scmp.eq.s32.totalorder %s20, 1
      %p38 = por %p36, %p37
      %p39 = scmp.ne.s32.totalorder %s28, %s29
      %p40 = scmp.eq.s32.totalorder %s20, 0
      %p41 = por %p39, %p40
      %p42 = scmp.ne.s32.totalorder %s28, %s29
      %p43 = scmp.eq.s32.totalorder %s21, 1
      %p44 = por %p42, %p43
      %p46 = scmp.ne.s32.totalorder %s29, %s45
      %p47 = scmp.eq.s32.totalorder %s21, 0
      %p48 = por %p46, %p47
      %s50 = sadd.s32 %s49, 1
      %p53 = scmp.eq.s32.totalorder %s15, 1
      %p54 = scmp.ne.s32.totalorder %s49, %s51
      %p55 = scmp.eq.s32.totalorder %s15, 0
      %p56 = por %p54, %p55
      %p57 = scmp.ne.s32.totalorder %s49, %s51
      %p58 = scmp.eq.s32.totalorder %s20, 1
      %p59 = por %p57, %p58
      %p60 = scmp.ne.s32.totalorder %s51, %s52
      %p61 = scmp.eq.s32.totalorder %s20, 0
      %p62 = por %p60, %p61
      %p63 = scmp.ne.s32.totalorder %s51, %s52
      %p64 = scmp.eq.s32.totalorder %s21, 1
      %p65 = por %p63, %p64
      %p67 = scmp.ne.s32.totalorder %s52, %s66
      %p68 = scmp.eq.s32.totalorder %s21, 0
      %p69 = por %p67, %p68
      %s71 = sadd.s32 %s70, 1
      %p74 = scmp.eq.s32.totalorder %s15, 1
      %p75 = scmp.ne.s32.totalorder %s70, %s72
      %p76 = scmp.eq.s32.totalorder %s15, 0
      %p77 = por %p75, %p76
      %p78 = scmp.ne.s32.totalorder %s70, %s72
      %p79 = scmp.eq.s32.totalorder %s20, 1
      %p80 = por %p78, %p79
      %p81 = scmp.ne.s32.totalorder %s72, %s73
      %p82 = scmp.eq.s32.totalorder %s20, 0
      %p83 = por %p81, %p82
      %p84 = scmp.ne.s32.totalorder %s72, %s73
      %p85 = scmp.eq.s32.totalorder %s21, 1
      %p86 = por %p84, %p85
      %p88 = scmp.ne.s32.totalorder %s73, %s87
      %p89 = scmp.eq.s32.totalorder %s21, 0
      %p90 = por %p88, %p89
      %s92 = sadd.s32 %s91, 1
      %p95 = scmp.eq.s32.totalorder %s15, 1
      %p96 = scmp.ne.s32.totalorder %s91, %s93
      %p97 = scmp.eq.s32.totalorder %s15, 0
      %p98 = por %p96, %p97
      %p99 = scmp.ne.s32.totalorder %s91, %s93
      %p100 = scmp.eq.s32.totalorder %s20, 1
      %p101 = por %p99, %p100
      %p102 = scmp.ne.s32.totalorder %s93, %s94
      %p103 = scmp.eq.s32.totalorder %s20, 0
      %p104 = por %p102, %p103
      %p105 = scmp.ne.s32.totalorder %s93, %s94
      %p106 = scmp.eq.s32.totalorder %s21, 1
      %p107 = por %p105, %p106
      %p109 = scmp.ne.s32.totalorder %s94, %s108
      %p110 = scmp.eq.s32.totalorder %s21, 0
      %p111 = por %p109, %p110
      %s113 = sadd.s32 %s112, 1
      %p116 = scmp.eq.s32.totalorder %s15, 1
      %p117 = scmp.ne.s32.totalorder %s112, %s114
      %p118 = scmp.eq.s32.totalorder %s15, 0
      %p119 = por %p117, %p118
      %p120 = scmp.ne.s32.totalorder %s112, %s114
      %p121 = scmp.eq.s32.totalorder %s20, 1
      %p122 = por %p120, %p121
      %p123 = scmp.ne.s32.totalorder %s114, %s115
      %p124 = scmp.eq.s32.totalorder %s20, 0
      %p125 = por %p123, %p124
      %p126 = scmp.ne.s32.totalorder %s114, %s115
      %p127 = scmp.eq.s32.totalorder %s21, 1
      %p128 = por %p126, %p127
      %p130 = scmp.ne.s32.totalorder %s115, %s129
      %p131 = scmp.eq.s32.totalorder %s21, 0
      %p132 = por %p130, %p131
      %s134 = sadd.s32 %s133, 1
      %p137 = scmp.eq.s32.totalorder %s15, 1
      %p138 = scmp.ne.s32.totalorder %s133, %s135
      %p139 = scmp.eq.s32.totalorder %s15, 0
      %p140 = por %p138, %p139
      %p141 = scmp.ne.s32.totalorder %s133, %s135
      %p142 = scmp.eq.s32.totalorder %s20, 1
      %p143 = por %p141, %p142
      %p144 = scmp.ne.s32.totalorder %s135, %s136
      %p145 = scmp.eq.s32.totalorder %s20, 0
      %p146 = por %p144, %p145
      %p147 = scmp.ne.s32.totalorder %s135, %s136
      %p148 = scmp.eq.s32.totalorder %s21, 1
      %p149 = por %p147, %p148
      %p151 = scmp.ne.s32.totalorder %s136, %s150
      %p152 = scmp.eq.s32.totalorder %s21, 0
      %p153 = por %p151, %p152
      %s154 = ssub.s32 %s15, %s22
      %p155 = scmp.eq.s32.totalorder %s154, 0
      %s157 = sadd.s32 %s156, 1
      %s158 = scalar_select %p155, %s156, %s157
      %p161 = pneg %p155
      %p162 = scmp.eq.s32.totalorder %s15, 1
      %p163 = por %p161, %p162
      %p164 = scmp.ne.s32.totalorder %s156, %s159
      %p165 = scmp.eq.s32.totalorder %s15, 0
      %p166 = por %p164, %p165
      %p167 = scmp.ne.s32.totalorder %s156, %s159
      %p168 = scmp.eq.s32.totalorder %s20, 1
      %p169 = por %p167, %p168
      %p170 = scmp.ne.s32.totalorder %s159, %s160
      %p171 = scmp.eq.s32.totalorder %s20, 0
      %p172 = por %p170, %p171
      %p173 = scmp.ne.s32.totalorder %s159, %s160
      %p174 = scmp.eq.s32.totalorder %s21, 1
      %p175 = por %p173, %p174
      %p177 = scmp.ne.s32.totalorder %s160, %s176
      %p178 = scmp.eq.s32.totalorder %s21, 0
      %p179 = por %p177, %p178
      %p180 = scmp.le.s32.totalorder 1, %s15
      %p181 = scmp.lt.s32.totalorder %s15, 3
      %p182 = pnand %p180, %p181
      %p183 = pneg %p182
      // Predicated region
      $region9: #{tpu_custom_call.1} parent=5 // pred_check
        _
      $region10: #{tpu_custom_call.1} parent=5 // pred_check_branch
        %185 = sbr.rel (%p182) target = $region12
      $region11: #{tpu_custom_call.1} parent=5 // pred_region
        %s186 = ssub.s32 %s15, 1
        // Predicated region
        $region13: #{tpu_custom_call.1} parent=11 // pred_check
          %p187 = pneg %p62
        $region14: #{tpu_custom_call.1} parent=11 // pred_check_branch
          %189 = sbr.rel (%p187) target = $region16
        $region15: #{tpu_custom_call.1} parent=11 // pred_region
          _
        $region16: #{tpu_custom_call.1} parent=11 // pred_fallthru
          _
        // Predicated region
        $region17: #{tpu_custom_call.1} parent=11 // pred_check
          %p190 = pneg %p83
        $region18: #{tpu_custom_call.1} parent=11 // pred_check_branch
          %192 = sbr.rel (%p190) target = $region20
        $region19: #{tpu_custom_call.1} parent=11 // pred_region
          _
        $region20: #{tpu_custom_call.1} parent=11 // pred_fallthru
          _
        // Predicated region
        $region21: #{tpu_custom_call.1} parent=11 // pred_check
          %p193 = pneg %p104
        $region22: #{tpu_custom_call.1} parent=11 // pred_check_branch
          %195 = sbr.rel (%p193) target = $region24
        $region23: #{tpu_custom_call.1} parent=11 // pred_region
          _
        $region24: #{tpu_custom_call.1} parent=11 // pred_fallthru
          _
        // Predicated region
        $region25: #{tpu_custom_call.1} parent=11 // pred_check
          %p196 = pneg %p125
        $region26: #{tpu_custom_call.1} parent=11 // pred_check_branch
          %198 = sbr.rel (%p196) target = $region28
        $region27: #{tpu_custom_call.1} parent=11 // pred_region
          _
        $region28: #{tpu_custom_call.1} parent=11 // pred_fallthru
          _
        // Predicated region
        $region29: #{tpu_custom_call.1} parent=11 // pred_check
          %p199 = pneg %p146
        $region30: #{tpu_custom_call.1} parent=11 // pred_check_branch
          %201 = sbr.rel (%p199) target = $region32
        $region31: #{tpu_custom_call.1} parent=11 // pred_region
          _
        $region32: #{tpu_custom_call.1} parent=11 // pred_fallthru
          _
      $region12: #{tpu_custom_call.1} parent=5 // pred_fallthru
        _
      %p202 = scmp.lt.s32.totalorder %s15, 2
      // Predicated region
      $region33: #{tpu_custom_call.1} parent=5 // pred_check
        %p203 = pneg %p202
      $region34: #{tpu_custom_call.1} parent=5 // pred_check_branch
        %205 = sbr.rel (%p203) target = $region36
      $region35: #{tpu_custom_call.1} parent=5 // pred_region
        // Predicated region
        $region37: #{tpu_custom_call.1} parent=35 // pred_check
          %p206 = pneg %p35
        $region38: #{tpu_custom_call.1} parent=35 // pred_check_branch
          %208 = sbr.rel (%p206) target = $region40
        $region39: #{tpu_custom_call.1} parent=35 // pred_region
          %s209 = smul.u32 32, %s15
          %p210 = scmp.lt.s32.totalorder %s209, 63
          %s211 = scalar_select %p210, %s209, 63
          %s212 = smul.addr %s211, 8
          %s213 = scalar_lea.vmem %s0, %s212
          %s214 = smul.u32 32, %s15
        $region40: #{tpu_custom_call.1} parent=35 // pred_fallthru
          _
      $region36: #{tpu_custom_call.1} parent=5 // pred_fallthru
        _
      %p215 = scmp.le.s32.totalorder 1, %s15
      %p216 = scmp.lt.s32.totalorder %s15, 3
      %p217 = pnand %p215, %p216
      %p218 = pneg %p217
      // Predicated region
      $region41: #{tpu_custom_call.1} parent=5 // pred_check
        _
      $region42: #{tpu_custom_call.1} parent=5 // pred_check_branch
        %220 = sbr.rel (%p217) target = $region44
      $region43: #{tpu_custom_call.1} parent=5 // pred_region
        %s221 = ssub.s32 %s15, 1
        %s222 = smul.u32 32, %s20
        %p223 = scmp.lt.s32.totalorder %s222, 63
        %s224 = scalar_select %p223, %s222, 63
        %s225 = smul.addr %s224, 8
        %s226 = scalar_lea.vmem %s0, %s225
        %p227 = pneg %p41
        %p228 = pneg %p38
        %p229 = pneg %p62
        %p230 = pneg %p59
        %p231 = pneg %p83
        %p232 = pneg %p80
        %p233 = pneg %p104
        %p234 = pneg %p101
        %p235 = pneg %p125
        %p236 = pneg %p122
        %p237 = pneg %p146
        %p238 = pneg %p143
        %p239 = pneg %p172
        %p240 = pneg %p169
        %s241 = sand.u32 %s159, 1
        %s242 = scalar_lea.sflag [#allocation3], %s241
        %s243 = sand.u32 %s159, 1
        %s244 = scalar_lea.vmem [#allocation2], %s243
        %s245 = smul.u32 32, %s20
        %p246 = scmp.lt.s32.totalorder %s245, 63
        %s247 = scalar_select %p246, %s245, 63
        %s248 = smul.addr %s247, 8
        %s249 = scalar_lea.vmem %s0, %s248
        %s250 = smul.u32 32, %s20
        %v251 = vld [vmem:[%s249] sm:$0xff]
        %v252 = vld [vmem:[%s249 + $0x8] sm:$0xff]
        %v253 = vld [vmem:[%s249 + $0x10] sm:$0xff]
        %v254 = vld [vmem:[%s249 + $0x18] sm:$0xff]
        %v255 = vld [vmem:[%s249 + $0x20] sm:$0xff]
        %v256 = vld [vmem:[%s249 + $0x28] sm:$0xff]
        %v257 = vld [vmem:[%s249 + $0x30] sm:$0xff]
        %v258 = vld [vmem:[%s249 + $0x38] sm:$0xff]
        %v259 = vld [vmem:[%s249 + $0x40] sm:$0xff]
        %v260 = vld [vmem:[%s249 + $0x48] sm:$0xff]
        %v261 = vld [vmem:[%s249 + $0x50] sm:$0xff]
        %v262 = vld [vmem:[%s249 + $0x58] sm:$0xff]
        %v263 = vld [vmem:[%s249 + $0x60] sm:$0xff]
        %v264 = vld [vmem:[%s249 + $0x68] sm:$0xff]
        %v265 = vld [vmem:[%s249 + $0x70] sm:$0xff]
        %v266 = vld [vmem:[%s249 + $0x78] sm:$0xff]
        %v267 = vld [vmem:[%s249 + $0x80] sm:$0xff]
        %v268 = vld [vmem:[%s249 + $0x88] sm:$0xff]
        %v269 = vld [vmem:[%s249 + $0x90] sm:$0xff]
        %v270 = vld [vmem:[%s249 + $0x98] sm:$0xff]
        %v271 = vld [vmem:[%s249 + $0xa0] sm:$0xff]
        %v272 = vld [vmem:[%s249 + $0xa8] sm:$0xff]
        %v273 = vld [vmem:[%s249 + $0xb0] sm:$0xff]
        %v274 = vld [vmem:[%s249 + $0xb8] sm:$0xff]
        %v275 = vld [vmem:[%s249 + $0xc0] sm:$0xff]
        %v276 = vld [vmem:[%s249 + $0xc8] sm:$0xff]
        %v277 = vld [vmem:[%s249 + $0xd0] sm:$0xff]
        %v278 = vld [vmem:[%s249 + $0xd8] sm:$0xff]
        %v279 = vld [vmem:[%s249 + $0xe0] sm:$0xff]
        %v280 = vld [vmem:[%s249 + $0xe8] sm:$0xff]
        %v281 = vld [vmem:[%s249 + $0xf0] sm:$0xff]
        %v282 = vld [vmem:[%s249 + $0xf8] sm:$0xff]
        %v283 = vld [vmem:[%s1] sm:$0xff]
        %v284 = vld [vmem:[%s1 + $0x8] sm:$0xff]
        %v285 = vld [vmem:[%s1 + $0x10] sm:$0xff]
        %v286 = vld [vmem:[%s1 + $0x18] sm:$0xff]
        %v287 = vld [vmem:[%s1 + $0x20] sm:$0xf]
        %v288 = vld [vmem:[%s2] sm:$0x1]
        %v290 = vlaneseq
        %v291 = vshrl.u32 %v290, 7
        %v292 = vsub.s32 0, %v291
        %v293 = vrot.slane %v288, %v292
        %vm295 = vcmask 293888
        %v297 = vsel %vm295, %v251, 0
        %v300 = vsel %vm295, %v252, 0
        %v303 = vsel %vm295, %v253, 0
        %v306 = vsel %vm295, %v254, 0
        %v309 = vsel %vm295, %v255, 0
        %v312 = vsel %vm295, %v256, 0
        %v315 = vsel %vm295, %v257, 0
        %v318 = vsel %vm295, %v258, 0
        %v321 = vsel %vm295, %v259, 0
        %v324 = vsel %vm295, %v260, 0
        %v327 = vsel %vm295, %v261, 0
        %v330 = vsel %vm295, %v262, 0
        %v333 = vsel %vm295, %v263, 0
        %v336 = vsel %vm295, %v264, 0
        %v339 = vsel %vm295, %v265, 0
        %v342 = vsel %vm295, %v266, 0
        %v345 = vsel %vm295, %v267, 0
        %v348 = vsel %vm295, %v268, 0
        %v351 = vsel %vm295, %v269, 0
        %v354 = vsel %vm295, %v270, 0
        %v357 = vsel %vm295, %v271, 0
        %v360 = vsel %vm295, %v272, 0
        %v363 = vsel %vm295, %v273, 0
        %v366 = vsel %vm295, %v274, 0
        %v369 = vsel %vm295, %v275, 0
        %v372 = vsel %vm295, %v276, 0
        %v375 = vsel %vm295, %v277, 0
        %v378 = vsel %vm295, %v278, 0
        %v381 = vsel %vm295, %v279, 0
        %v384 = vsel %vm295, %v280, 0
        %v387 = vsel %vm295, %v281, 0
        %v390 = vsel %vm295, %v282, 0
        %vm392 = vcmask 1043456
        %v394 = vsel %vm392, %v287, 0
        %396 = vmatprep.subr.mxu0 0.0
        %397 = vmatpush1.msra.mxu0 0.0
        %398 = vmatprep.subr.mxu0 0.0
        %399 = vmatpush1.msra.mxu0 0.0
        %400 = vmatprep.subr.mxu0 0.0
        %401 = vmatpush1.msra.mxu0 0.0
        %402 = vmatprep.subr.mxu0 0.0
        %403 = vmatpush1.msra.mxu0 0.0
        %404 = vmatprep.subr.mxu0 0.0
        %405 = vmatpush1.msra.mxu0 0.0
        %406 = vmatprep.subr.mxu0 0.0
        %407 = vmatpush1.msra.mxu0 0.0
        %408 = vmatprep.subr.mxu0 0.0
        %409 = vmatpush1.msra.mxu0 0.0
        %410 = vmatprep.subr.mxu0 0.0
        %411 = vmatpush1.msra.mxu0 0.0
        %412 = vmatprep.subr.mxu0 0.0
        %413 = vmatpush1.msra.mxu0 0.0
        %414 = vmatprep.subr.mxu0 0.0
        %415 = vmatpush1.msra.mxu0 0.0
        %416 = vmatprep.subr.mxu0 0.0
        %417 = vmatpush1.msra.mxu0 0.0
        %418 = vmatprep.subr.mxu0 0.0
        %419 = vmatpush1.msra.mxu0 %v394
        %420 = vmatprep.subr.mxu0 0.0
        %421 = vmatpush1.msra.mxu0 %v286
        %422 = vmatprep.subr.mxu0 0.0
        %423 = vmatpush1.msra.mxu0 %v285
        %424 = vmatprep.subr.mxu0 0.0
        %425 = vmatpush1.msra.mxu0 %v284
        %426 = vmatprep.subr.mxu0 0.0
        %427 = vmatpush1.msra.mxu0 %v283
        %428 = vmatprep.subr.mxu0 0.0
        %429 = vmatpush2.msra.mxu0 0.0
        %430 = vmatprep.subr.mxu0 0.0
        %431 = vmatpush2.msra.mxu0 0.0
        %432 = vmatprep.subr.mxu0 0.0
        %433 = vmatpush2.msra.mxu0 0.0
        %434 = vmatprep.subr.mxu0 0.0
        %435 = vmatpush2.msra.mxu0 0.0
        %436 = vmatprep.subr.mxu0 0.0
        %437 = vmatpush2.msra.mxu0 0.0
        %438 = vmatprep.subr.mxu0 0.0
        %439 = vmatpush2.msra.mxu0 0.0
        %440 = vmatprep.subr.mxu0 0.0
        %441 = vmatpush2.msra.mxu0 0.0
        %442 = vmatprep.subr.mxu0 0.0
        %443 = vmatpush2.msra.mxu0 0.0
        %444 = vmatprep.subr.mxu0 0.0
        %445 = vmatpush2.msra.mxu0 0.0
        %446 = vmatprep.subr.mxu0 0.0
        %447 = vmatpush2.msra.mxu0 0.0
        %448 = vmatprep.subr.mxu0 0.0
        %449 = vmatpush2.msra.mxu0 0.0
        %450 = vmatprep.subr.mxu0 0.0
        %451 = vmatpush2.msra.mxu0 0.0
        %452 = vmatprep.subr.mxu0 0.0
        %453 = vmatpush2.msra.mxu0 0.0
        %454 = vmatprep.subr.mxu0 0.0
        %455 = vmatpush2.msra.mxu0 0.0
        %456 = vmatprep.subr.mxu0 0.0
        %457 = vmatpush2.msra.mxu0 0.0
        %458 = vmatprep.subr.mxu0 0.0
        %459 = vmatpush2.msra.mxu0 0.0
        %460 = vmatprep.mubr.f32.mxu0 0.0
        %461 = vmatmul.mubr.f32.gmra.mxu0 %v297
        %v462 = vpop.f32.mrf.mxu0
        %v463 = vadd.f32 %v293, %v462
        %v464 = vpop.f32.mrf.mxu0
        %465 = vmatprep.mubr.f32.mxu0 0.0
        %466 = vmatmul.mubr.f32.gmra.mxu0 %v300
        %v467 = vpop.f32.mrf.mxu0
        %v468 = vadd.f32 %v293, %v467
        %v469 = vpop.f32.mrf.mxu0
        %470 = vmatprep.mubr.f32.mxu0 0.0
        %471 = vmatmul.mubr.f32.gmra.mxu0 %v303
        %v472 = vpop.f32.mrf.mxu0
        %v473 = vadd.f32 %v293, %v472
        %v474 = vpop.f32.mrf.mxu0
        %475 = vmatprep.mubr.f32.mxu0 0.0
        %476 = vmatmul.mubr.f32.gmra.mxu0 %v306
        %v477 = vpop.f32.mrf.mxu0
        %v478 = vadd.f32 %v293, %v477
        %v479 = vpop.f32.mrf.mxu0
        %480 = vmatprep.mubr.f32.mxu0 0.0
        %481 = vmatmul.mubr.f32.gmra.mxu0 %v309
        %v482 = vpop.f32.mrf.mxu0
        %v483 = vadd.f32 %v293, %v482
        %v484 = vpop.f32.mrf.mxu0
        %485 = vmatprep.mubr.f32.mxu0 0.0
        %486 = vmatmul.mubr.f32.gmra.mxu0 %v312
        %v487 = vpop.f32.mrf.mxu0
        %v488 = vadd.f32 %v293, %v487
        %v489 = vpop.f32.mrf.mxu0
        %490 = vmatprep.mubr.f32.mxu0 0.0
        %491 = vmatmul.mubr.f32.gmra.mxu0 %v315
        %v492 = vpop.f32.mrf.mxu0
        %v493 = vadd.f32 %v293, %v492
        %v494 = vpop.f32.mrf.mxu0
        %495 = vmatprep.mubr.f32.mxu0 0.0
        %496 = vmatmul.mubr.f32.gmra.mxu0 %v318
        %v497 = vpop.f32.mrf.mxu0
        %v498 = vadd.f32 %v293, %v497
        %v499 = vpop.f32.mrf.mxu0
        %500 = vmatprep.mubr.f32.mxu0 0.0
        %501 = vmatmul.mubr.f32.gmra.mxu0 %v321
        %v502 = vpop.f32.mrf.mxu0
        %v503 = vadd.f32 %v293, %v502
        %v504 = vpop.f32.mrf.mxu0
        %505 = vmatprep.mubr.f32.mxu0 0.0
        %506 = vmatmul.mubr.f32.gmra.mxu0 %v324
        %v507 = vpop.f32.mrf.mxu0
        %v508 = vadd.f32 %v293, %v507
        %v509 = vpop.f32.mrf.mxu0
        %510 = vmatprep.mubr.f32.mxu0 0.0
        %511 = vmatmul.mubr.f32.gmra.mxu0 %v327
        %v512 = vpop.f32.mrf.mxu0
        %v513 = vadd.f32 %v293, %v512
        %v514 = vpop.f32.mrf.mxu0
        %515 = vmatprep.mubr.f32.mxu0 0.0
        %516 = vmatmul.mubr.f32.gmra.mxu0 %v330
        %v517 = vpop.f32.mrf.mxu0
        %v518 = vadd.f32 %v293, %v517
        %v519 = vpop.f32.mrf.mxu0
        %520 = vmatprep.mubr.f32.mxu0 0.0
        %521 = vmatmul.mubr.f32.gmra.mxu0 %v333
        %v522 = vpop.f32.mrf.mxu0
        %v523 = vadd.f32 %v293, %v522
        %v524 = vpop.f32.mrf.mxu0
        %525 = vmatprep.mubr.f32.mxu0 0.0
        %526 = vmatmul.mubr.f32.gmra.mxu0 %v336
        %v527 = vpop.f32.mrf.mxu0
        %v528 = vadd.f32 %v293, %v527
        %v529 = vpop.f32.mrf.mxu0
        %530 = vmatprep.mubr.f32.mxu0 0.0
        %531 = vmatmul.mubr.f32.gmra.mxu0 %v339
        %v532 = vpop.f32.mrf.mxu0
        %v533 = vadd.f32 %v293, %v532
        %v534 = vpop.f32.mrf.mxu0
        %535 = vmatprep.mubr.f32.mxu0 0.0
        %536 = vmatmul.mubr.f32.gmra.mxu0 %v342
        %v537 = vpop.f32.mrf.mxu0
        %v538 = vadd.f32 %v293, %v537
        %v539 = vpop.f32.mrf.mxu0
        %540 = vmatprep.mubr.f32.mxu0 0.0
        %541 = vmatmul.mubr.f32.gmra.mxu0 %v345
        %v542 = vpop.f32.mrf.mxu0
        %v543 = vadd.f32 %v293, %v542
        %v544 = vpop.f32.mrf.mxu0
        %545 = vmatprep.mubr.f32.mxu0 0.0
        %546 = vmatmul.mubr.f32.gmra.mxu0 %v348
        %v547 = vpop.f32.mrf.mxu0
        %v548 = vadd.f32 %v293, %v547
        %v549 = vpop.f32.mrf.mxu0
        %550 = vmatprep.mubr.f32.mxu0 0.0
        %551 = vmatmul.mubr.f32.gmra.mxu0 %v351
        %v552 = vpop.f32.mrf.mxu0
        %v553 = vadd.f32 %v293, %v552
        %v554 = vpop.f32.mrf.mxu0
        %555 = vmatprep.mubr.f32.mxu0 0.0
        %556 = vmatmul.mubr.f32.gmra.mxu0 %v354
        %v557 = vpop.f32.mrf.mxu0
        %v558 = vadd.f32 %v293, %v557
        %v559 = vpop.f32.mrf.mxu0
        %560 = vmatprep.mubr.f32.mxu0 0.0
        %561 = vmatmul.mubr.f32.gmra.mxu0 %v357
        %v562 = vpop.f32.mrf.mxu0
        %v563 = vadd.f32 %v293, %v562
        %v564 = vpop.f32.mrf.mxu0
        %565 = vmatprep.mubr.f32.mxu0 0.0
        %566 = vmatmul.mubr.f32.gmra.mxu0 %v360
        %v567 = vpop.f32.mrf.mxu0
        %v568 = vadd.f32 %v293, %v567
        %v569 = vpop.f32.mrf.mxu0
        %570 = vmatprep.mubr.f32.mxu0 0.0
        %571 = vmatmul.mubr.f32.gmra.mxu0 %v363
        %v572 = vpop.f32.mrf.mxu0
        %v573 = vadd.f32 %v293, %v572
        %v574 = vpop.f32.mrf.mxu0
        %575 = vmatprep.mubr.f32.mxu0 0.0
        %576 = vmatmul.mubr.f32.gmra.mxu0 %v366
        %v577 = vpop.f32.mrf.mxu0
        %v578 = vadd.f32 %v293, %v577
        %v579 = vpop.f32.mrf.mxu0
        %580 = vmatprep.mubr.f32.mxu0 0.0
        %581 = vmatmul.mubr.f32.gmra.mxu0 %v369
        %v582 = vpop.f32.mrf.mxu0
        %v583 = vadd.f32 %v293, %v582
        %v584 = vpop.f32.mrf.mxu0
        %585 = vmatprep.mubr.f32.mxu0 0.0
        %586 = vmatmul.mubr.f32.gmra.mxu0 %v372
        %v587 = vpop.f32.mrf.mxu0
        %v588 = vadd.f32 %v293, %v587
        %v589 = vpop.f32.mrf.mxu0
        %590 = vmatprep.mubr.f32.mxu0 0.0
        %591 = vmatmul.mubr.f32.gmra.mxu0 %v375
        %v592 = vpop.f32.mrf.mxu0
        %v593 = vadd.f32 %v293, %v592
        %v594 = vpop.f32.mrf.mxu0
        %595 = vmatprep.mubr.f32.mxu0 0.0
        %596 = vmatmul.mubr.f32.gmra.mxu0 %v378
        %v597 = vpop.f32.mrf.mxu0
        %v598 = vadd.f32 %v293, %v597
        %v599 = vpop.f32.mrf.mxu0
        %600 = vmatprep.mubr.f32.mxu0 0.0
        %601 = vmatmul.mubr.f32.gmra.mxu0 %v381
        %v602 = vpop.f32.mrf.mxu0
        %v603 = vadd.f32 %v293, %v602
        %v604 = vpop.f32.mrf.mxu0
        %605 = vmatprep.mubr.f32.mxu0 0.0
        %606 = vmatmul.mubr.f32.gmra.mxu0 %v384
        %v607 = vpop.f32.mrf.mxu0
        %v608 = vadd.f32 %v293, %v607
        %v609 = vpop.f32.mrf.mxu0
        %610 = vmatprep.mubr.f32.mxu0 0.0
        %611 = vmatmul.mubr.f32.gmra.mxu0 %v387
        %v612 = vpop.f32.mrf.mxu0
        %v613 = vadd.f32 %v293, %v612
        %v614 = vpop.f32.mrf.mxu0
        %615 = vmatprep.mubr.f32.mxu0 0.0
        %616 = vmatmul.mubr.f32.gmra.mxu0 %v390
        %v617 = vpop.f32.mrf.mxu0
        %v618 = vadd.f32 %v293, %v617
        %v619 = vpop.f32.mrf.mxu0
        %620 = vdwg.mxu0
        %v621 = vmax.f32 %v463, 0.0
        %v622 = vmax.f32 %v468, 0.0
        %v623 = vmax.f32 %v473, 0.0
        %v624 = vmax.f32 %v478, 0.0
        %v625 = vmax.f32 %v483, 0.0
        %v626 = vmax.f32 %v488, 0.0
        %v627 = vmax.f32 %v493, 0.0
        %v628 = vmax.f32 %v498, 0.0
        %v629 = vmax.f32 %v503, 0.0
        %v630 = vmax.f32 %v508, 0.0
        %v631 = vmax.f32 %v513, 0.0
        %v632 = vmax.f32 %v518, 0.0
        %v633 = vmax.f32 %v523, 0.0
        %v634 = vmax.f32 %v528, 0.0
        %v635 = vmax.f32 %v533, 0.0
        %v636 = vmax.f32 %v538, 0.0
        %v637 = vmax.f32 %v543, 0.0
        %v638 = vmax.f32 %v548, 0.0
        %v639 = vmax.f32 %v553, 0.0
        %v640 = vmax.f32 %v558, 0.0
        %v641 = vmax.f32 %v563, 0.0
        %v642 = vmax.f32 %v568, 0.0
        %v643 = vmax.f32 %v573, 0.0
        %v644 = vmax.f32 %v578, 0.0
        %v645 = vmax.f32 %v583, 0.0
        %v646 = vmax.f32 %v588, 0.0
        %v647 = vmax.f32 %v593, 0.0
        %v648 = vmax.f32 %v598, 0.0
        %v649 = vmax.f32 %v603, 0.0
        %v650 = vmax.f32 %v608, 0.0
        %v651 = vmax.f32 %v613, 0.0
        %v652 = vmax.f32 %v618, 0.0
        %v653 = vld [vmem:[%s3] sm:$0x3]
        %v655 = vlaneseq
        %v656 = vshrl.u32 %v655, 7
        %v657 = vsub.s32 0, %v656
        %v658 = vrot.slane %v653, %v657
        %v659 = vlaneseq
        %v660 = vshrl.u32 %v659, 7
        %v661 = vsub.s32 1, %v660
        %v662 = vrot.slane %v653, %v661
        %665 = vmatprep.subr.mxu0 0.0
        %666 = vmatpush1.msra.mxu0 %v636
        %667 = vmatprep.subr.mxu0 0.0
        %668 = vmatpush1.msra.mxu0 %v635
        %669 = vmatprep.subr.mxu0 0.0
        %670 = vmatpush1.msra.mxu0 %v634
        %671 = vmatprep.subr.mxu0 0.0
        %672 = vmatpush1.msra.mxu0 %v633
        %673 = vmatprep.subr.mxu0 0.0
        %674 = vmatpush1.msra.mxu0 %v632
        %675 = vmatprep.subr.mxu0 0.0
        %676 = vmatpush1.msra.mxu0 %v631
        %677 = vmatprep.subr.mxu0 0.0
        %678 = vmatpush1.msra.mxu0 %v630
        %679 = vmatprep.subr.mxu0 0.0
        %680 = vmatpush1.msra.mxu0 %v629
        %681 = vmatprep.subr.mxu0 0.0
        %682 = vmatpush1.msra.mxu0 %v628
        %683 = vmatprep.subr.mxu0 0.0
        %684 = vmatpush1.msra.mxu0 %v627
        %685 = vmatprep.subr.mxu0 0.0
        %686 = vmatpush1.msra.mxu0 %v626
        %687 = vmatprep.subr.mxu0 0.0
        %688 = vmatpush1.msra.mxu0 %v625
        %689 = vmatprep.subr.mxu0 0.0
        %690 = vmatpush1.msra.mxu0 %v624
        %691 = vmatprep.subr.mxu0 0.0
        %692 = vmatpush1.msra.mxu0 %v623
        %693 = vmatprep.subr.mxu0 0.0
        %694 = vmatpush1.msra.mxu0 %v622
        %695 = vmatprep.subr.mxu0 0.0
        %696 = vmatpush1.msra.mxu0 %v621
        %697 = vmatprep.subr.mxu0 0.0
        %698 = vmatpush2.msra.mxu0 %v652
        %699 = vmatprep.subr.mxu0 0.0
        %700 = vmatpush2.msra.mxu0 %v651
        %701 = vmatprep.subr.mxu0 0.0
        %702 = vmatpush2.msra.mxu0 %v650
        %703 = vmatprep.subr.mxu0 0.0
        %704 = vmatpush2.msra.mxu0 %v649
        %705 = vmatprep.subr.mxu0 0.0
        %706 = vmatpush2.msra.mxu0 %v648
        %707 = vmatprep.subr.mxu0 0.0
        %708 = vmatpush2.msra.mxu0 %v647
        %709 = vmatprep.subr.mxu0 0.0
        %710 = vmatpush2.msra.mxu0 %v646
        %711 = vmatprep.subr.mxu0 0.0
        %712 = vmatpush2.msra.mxu0 %v645
        %713 = vmatprep.subr.mxu0 0.0
        %714 = vmatpush2.msra.mxu0 %v644
        %715 = vmatprep.subr.mxu0 0.0
        %716 = vmatpush2.msra.mxu0 %v643
        %717 = vmatprep.subr.mxu0 0.0
        %718 = vmatpush2.msra.mxu0 %v642
        %719 = vmatprep.subr.mxu0 0.0
        %720 = vmatpush2.msra.mxu0 %v641
        %721 = vmatprep.subr.mxu0 0.0
        %722 = vmatpush2.msra.mxu0 %v640
        %723 = vmatprep.subr.mxu0 0.0
        %724 = vmatpush2.msra.mxu0 %v639
        %725 = vmatprep.subr.mxu0 0.0
        %726 = vmatpush2.msra.mxu0 %v638
        %727 = vmatprep.subr.mxu0 0.0
        %728 = vmatpush2.msra.mxu0 %v637
        %729 = vmatprep.mubr.f32.mxu0 %v662
        %730 = vmatmul.mubr.f32.gmra.mxu0 %v658
        %v731 = vpop.f32.mrf.mxu0
        %v732 = vadd.f32 0.0, %v731
        %v733 = vpop.f32.mrf.mxu0
        %734 = vdwg.mxu0
        %v735 = vld [vmem:[%s4] sm:$0xff]
        %v736 = vld [vmem:[%s4 + $0x8] sm:$0xff]
        %v737 = vld [vmem:[%s4 + $0x10] sm:$0xff]
        %v738 = vld [vmem:[%s4 + $0x18] sm:$0xff]
        %v739 = vld [vmem:[%s4 + $0x20] sm:$0xff]
        %v740 = vld [vmem:[%s4 + $0x28] sm:$0xff]
        %v741 = vld [vmem:[%s4 + $0x30] sm:$0xff]
        %v742 = vld [vmem:[%s4 + $0x38] sm:$0xff]
        %v743 = vld [vmem:[%s4 + $0x40] sm:$0xff]
        %v744 = vld [vmem:[%s4 + $0x48] sm:$0xff]
        %v745 = vld [vmem:[%s4 + $0x50] sm:$0xff]
        %v746 = vld [vmem:[%s4 + $0x58] sm:$0xff]
        %v747 = vld [vmem:[%s4 + $0x60] sm:$0xff]
        %v748 = vld [vmem:[%s4 + $0x68] sm:$0xff]
        %v749 = vld [vmem:[%s4 + $0x70] sm:$0xff]
        %v750 = vld [vmem:[%s4 + $0x78] sm:$0xff]
        %v751 = vld [vmem:[%s5] sm:$0x1]
        %752 = vmatprep.subr.mxu0 0.0
        %753 = vmatpush1.msra.mxu0 %v750
        %754 = vmatprep.subr.mxu0 0.0
        %755 = vmatpush1.msra.mxu0 %v749
        %756 = vmatprep.subr.mxu0 0.0
        %757 = vmatpush1.msra.mxu0 %v748
        %758 = vmatprep.subr.mxu0 0.0
        %759 = vmatpush1.msra.mxu0 %v747
        %760 = vmatprep.subr.mxu0 0.0
        %761 = vmatpush1.msra.mxu0 %v746
        %762 = vmatprep.subr.mxu0 0.0
        %763 = vmatpush1.msra.mxu0 %v745
        %764 = vmatprep.subr.mxu0 0.0
        %765 = vmatpush1.msra.mxu0 %v744
        %766 = vmatprep.subr.mxu0 0.0
        %767 = vmatpush1.msra.mxu0 %v743
        %768 = vmatprep.subr.mxu0 0.0
        %769 = vmatpush1.msra.mxu0 %v742
        %770 = vmatprep.subr.mxu0 0.0
        %771 = vmatpush1.msra.mxu0 %v741
        %772 = vmatprep.subr.mxu0 0.0
        %773 = vmatpush1.msra.mxu0 %v740
        %774 = vmatprep.subr.mxu0 0.0
        %775 = vmatpush1.msra.mxu0 %v739
        %776 = vmatprep.subr.mxu0 0.0
        %777 = vmatpush1.msra.mxu0 %v738
        %778 = vmatprep.subr.mxu0 0.0
        %779 = vmatpush1.msra.mxu0 %v737
        %780 = vmatprep.subr.mxu0 0.0
        %781 = vmatpush1.msra.mxu0 %v736
        %782 = vmatprep.subr.mxu0 0.0
        %783 = vmatpush1.msra.mxu0 %v735
        %784 = vmatprep.subr.mxu0 0.0
        %785 = vmatpush2.msra.mxu0 0.0
        %786 = vmatprep.subr.mxu0 0.0
        %787 = vmatpush2.msra.mxu0 0.0
        %788 = vmatprep.subr.mxu0 0.0
        %789 = vmatpush2.msra.mxu0 0.0
        %790 = vmatprep.subr.mxu0 0.0
        %791 = vmatpush2.msra.mxu0 0.0
        %792 = vmatprep.subr.mxu0 0.0
        %793 = vmatpush2.msra.mxu0 0.0
        %794 = vmatprep.subr.mxu0 0.0
        %795 = vmatpush2.msra.mxu0 0.0
        %796 = vmatprep.subr.mxu0 0.0
        %797 = vmatpush2.msra.mxu0 0.0
        %798 = vmatprep.subr.mxu0 0.0
        %799 = vmatpush2.msra.mxu0 0.0
        %800 = vmatprep.subr.mxu0 0.0
        %801 = vmatpush2.msra.mxu0 0.0
        %802 = vmatprep.subr.mxu0 0.0
        %803 = vmatpush2.msra.mxu0 0.0
        %804 = vmatprep.subr.mxu0 0.0
        %805 = vmatpush2.msra.mxu0 0.0
        %806 = vmatprep.subr.mxu0 0.0
        %807 = vmatpush2.msra.mxu0 0.0
        %808 = vmatprep.subr.mxu0 0.0
        %809 = vmatpush2.msra.mxu0 0.0
        %810 = vmatprep.subr.mxu0 0.0
        %811 = vmatpush2.msra.mxu0 0.0
        %812 = vmatprep.subr.mxu0 0.0
        %813 = vmatpush2.msra.mxu0 0.0
        %814 = vmatprep.subr.mxu0 0.0
        %815 = vmatpush2.msra.mxu0 0.0
        %816 = vmatprep.mubr.f32.mxu0 0.0
        %817 = vmatmul.mubr.f32.gmra.mxu0 %v732
        %v818 = vpop.f32.mrf.mxu0
        %v819 = vadd.f32 %v751, %v818
        %v820 = vpop.f32.mrf.mxu0
        %821 = vdwg.mxu0
        %822 = vst [vmem:[%s244] sm:$0x1] %v819
        %s823 = sand.u32 %s159, 1
        %s824 = scalar_lea.sflag [#allocation3], %s823
        %s825 = sand.u32 %s159, 1
        %s826 = scalar_lea.vmem [#allocation2], %s825
        // Predicated region
        $region45: #{tpu_custom_call.1} parent=43 // pred_check
          %p827 = pneg %p169
        $region46: #{tpu_custom_call.1} parent=43 // pred_check_branch
          %829 = sbr.rel (%p827) target = $region48
        $region47: #{tpu_custom_call.1} parent=43 // pred_region
          %s831 = ssub.s32 16, 16
          %832 = vsyncadd %s824, %s831
          %s833 = smul.addr %s20, 16
          %s834 = scalar_lea.hbm %s6, %s833
          %s836 = sshll.u32 %s826, 4
          %s837 = int_to_ptr.vmem [resolvable:$true] %s836
          %839 = dma.vmem_to_hbm [thread:$0]  %s837, 16, %s834, %s824
        $region48: #{tpu_custom_call.1} parent=43 // pred_fallthru
          _
      $region44: #{tpu_custom_call.1} parent=5 // pred_fallthru
        _
      %p840 = scmp.le.s32.totalorder 2, %s15
      // Predicated region
      $region49: #{tpu_custom_call.1} parent=5 // pred_check
        %p841 = pneg %p840
      $region50: #{tpu_custom_call.1} parent=5 // pred_check_branch
        %843 = sbr.rel (%p841) target = $region52
      $region51: #{tpu_custom_call.1} parent=5 // pred_region
        %s844 = ssub.s32 %s15, 2
        // Predicated region
        $region53: #{tpu_custom_call.1} parent=51 // pred_check
          %p845 = pneg %p175
        $region54: #{tpu_custom_call.1} parent=51 // pred_check_branch
          %847 = sbr.rel (%p845) target = $region56
        $region55: #{tpu_custom_call.1} parent=51 // pred_region
          %s848 = sand.u32 %s160, 1
          %s849 = scalar_lea.sflag [#allocation3], %s848
          %s850 = sand.u32 %s160, 1
          %s851 = scalar_lea.vmem [#allocation2], %s850
          %852 = dma.done %s849, 16
        $region56: #{tpu_custom_call.1} parent=51 // pred_fallthru
          _
      $region52: #{tpu_custom_call.1} parent=5 // pred_fallthru
        _
    $region6: #{tpu_custom_call.1} parent=1 // loop_footer
      %s19 = sadd.s32 1, %s15
    $region7: #{tpu_custom_call.1} parent=1 // loop_footer_branch
      %14 = sbr.rel target = $region3
    $region8: #{tpu_custom_call.1} parent=1 // loop_exit
      _
    %853 = vsyncpa [#allocation3], 1
    %s854 = scalar_lea.sflag [#allocation3], 1
    %855 = vsyncpa %s854, 1

</llo_original>
